<compile_context>
chip_gen: v7x
topology: tpu7x:2x2x1
jax: 0.10.0
libtpu: 0.0.40
codegen_flags: <defaults>
</compile_context>

<pallas_src>
import functools

import jax
import jax.numpy as jnp
from jax.experimental import pallas as pl
from jax.experimental.pallas import tpu as pltpu

_MAX_LANES = 16384  # cap on the lane-dense width (keeps one row small)


def _round_up(x, m):
    return ((x + m - 1) // m) * m


def _normalize_kernel(img_ref, out_ref, *, scale, offset):
    # out = (img - mean) / std  ==  img * (1/std) + (-mean/std)
    x = img_ref[...].astype(jnp.float32)
    out_ref[...] = (x * scale + offset).astype(out_ref.dtype)


def _choose_lanes(n, wc):
    """Pick a lane-dense 2-D view (rows, lanes) of the flat image without any copy."""
    if wc % 128 == 0:
        return wc, n // wc  # free (H, W*C) view, fully lane-dense
    best = 0
    cap = min(n, _MAX_LANES)
    k = 128
    while k <= cap:
        if n % k == 0:
            best = k
        k += 128
    if best:
        return best, n // best
    # TODO(synk): no 128-multiple factorization of H*W*C; fall back to the free
    # (H, W*C) view (masked stores) rather than paying a full-image pad copy.
    return wc, n // wc


def _sublane_multiple(dtype):
    itemsize = jnp.dtype(dtype).itemsize
    return max(8, 32 // itemsize)  # f32 -> 8, bf16 -> 16, u8/i8 -> 32


def get_aug_forward(img, mask, mean, std, *, out_dtype=None, max_tile_bytes=None):
    """Pallas implementation of get_aug.forward (2D, deterministic path).

    img : (H, W, C), float or uint8
    mask: (H, W)
    mean/std must be Python / NumPy scalars (they are folded at trace time).
    Returns (img_normalized, mask) matching (img_aug, mask_aug).
    """
    H, W, C = img.shape
    in_dtype = jnp.dtype(img.dtype)
    if out_dtype is None:
        out_dtype = in_dtype if jnp.issubdtype(in_dtype, jnp.floating) else jnp.float32
    out_dtype = jnp.dtype(out_dtype)

    n = H * W * C
    lanes, rows = _choose_lanes(n, W * C)
    x2d = img.reshape(rows, lanes)  # free reshape of a contiguous array

    in_item = in_dtype.itemsize
    out_item = out_dtype.itemsize

    # Per-step byte budget (input tile + output tile). v7x has ~2.3x the HBM BW
    # of v6e, so bigger tiles amortize the fixed per-step overhead better there.
    if max_tile_bytes is None:
        try:
            kind = jax.devices()[0].device_kind.lower()
        except Exception:  # pragma: no cover - defensive
            kind = ""
        max_tile_bytes = (16 if "v7" in kind else 8) * 1024 * 1024

    row_mult = max(_sublane_multiple(in_dtype), _sublane_multiple(out_dtype))
    bytes_per_row = lanes * (in_item + out_item)
    br_budget = max(row_mult, (max_tile_bytes // bytes_per_row) // row_mult * row_mult)

    if rows <= 2 * row_mult:
        # Tiny image: a single full-extent block; nothing to pipeline.
        block_rows = rows
    else:
        # Keep >= 4 grid steps (even count so v7x's two TensorCores stay busy)
        # while respecting the tile-byte budget.
        target_steps = max(4, pl.cdiv(rows, br_budget))
        if target_steps % 2:
            target_steps += 1
        block_rows = min(br_budget, _round_up(pl.cdiv(rows, target_steps), row_mult))
        block_rows = min(block_rows, rows)
    grid = (pl.cdiv(rows, block_rows),)

    scale = float(1.0 / std)
    offset = float(-mean / std)
    kernel = functools.partial(_normalize_kernel, scale=scale, offset=offset)

    # VMEM limit sized to the actual double-buffered tile footprint (+ slack).
    tile_bytes = block_rows * lanes * (in_item + out_item)
    vmem_limit = int(max(4 * 1024 * 1024, 2 * tile_bytes + 2 * 1024 * 1024))

    y2d = pl.pallas_call(
        kernel,
        out_shape=jax.ShapeDtypeStruct((rows, lanes), out_dtype),
        grid=grid,
        in_specs=[pl.BlockSpec((block_rows, lanes), lambda i: (i, 0))],
        out_specs=pl.BlockSpec((block_rows, lanes), lambda i: (i, 0)),
        compiler_params=pltpu.CompilerParams(
            dimension_semantics=("parallel",),
            vmem_limit_bytes=vmem_limit,
        ),
        cost_estimate=pl.CostEstimate(
            flops=2 * n,
            transcendentals=0,
            bytes_accessed=n * in_item + n * out_item,
        ),
    )(x2d)

    img_aug = y2d.reshape(H, W, C)  # free reshape back
    mask_aug = mask  # pass-through (eval-mode / post-aug semantics)
    return img_aug, mask_aug


if __name__ == "__main__":
    key = jax.random.PRNGKey(0)
    k_img, k_mask = jax.random.split(key)

    H, W, C = 16, 16, 3
    # synthetic "image" in [0, 255) like a decoded uint8 image, kept float32
    img = jax.random.uniform(k_img, (H, W, C), dtype=jnp.float32) * 255.0
    # synthetic segmentation mask with a few classes
    mask = jax.random.randint(k_mask, (H, W), 0, 4, dtype=jnp.int32)

    # deterministic "cfgs.dataset.mean / std"
    mean = 127.5
    std = 58.395

    # float32 path
    img_aug, mask_aug = get_aug_forward(img, mask, mean, std)
    jax.block_until_ready(img_aug)
    jax.block_until_ready(mask_aug)

    ref_img = (img - mean) / std
    assert jnp.allclose(img_aug, ref_img, atol=1e-5, rtol=1e-5)
    assert jnp.array_equal(mask_aug, mask)

    # uint8 path (decoded image), cast happens inside the kernel
    img_u8 = img.astype(jnp.uint8)
    img_aug_u8, _ = get_aug_forward(img_u8, mask, mean, std)
    jax.block_until_ready(img_aug_u8)
    ref_u8 = (img_u8.astype(jnp.float32) - mean) / std
    assert jnp.allclose(img_aug_u8, ref_u8, atol=1e-5, rtol=1e-5)

    print("KERNEL_OK")
</pallas_src>

<mosaic_0001>
module attributes {stable_mosaic.version = 11 : i64} {
  func.func @_normalize_kernel(%arg0: i32, %arg1: memref<1x768xf32, #tpu.memory_space<vmem>>, %arg2: memref<1x768xf32, #tpu.memory_space<vmem>>) attributes {dimension_semantics = [#tpu.dimension_semantics<parallel>], iteration_bounds = array<i64: 1>, scalar_prefetch = 0 : i64, scratch_operands = 0 : i64, tpu.core_type = #tpu.core_type<tc>, window_params = [{transform_indices = @transform_0, window_bounds = array<i64: 1, 768>}, {transform_indices = @transform_1, window_bounds = array<i64: 1, 768>}]} {
    %c0 = arith.constant 0 : index
    %c0_0 = arith.constant 0 : index
    %0 = vector.load %arg1[%c0, %c0_0] : memref<1x768xf32, #tpu.memory_space<vmem>>, vector<1x768xf32>
    %cst = arith.constant 0.0171247534 : f32
    %1 = vector.broadcast %cst : f32 to vector<1x768xf32>
    %2 = arith.mulf %0, %1 : vector<1x768xf32>
    %cst_1 = arith.constant -2.18340611 : f32
    %3 = vector.broadcast %cst_1 : f32 to vector<1x768xf32>
    %4 = arith.addf %2, %3 : vector<1x768xf32>
    %c0_2 = arith.constant 0 : index
    %c0_3 = arith.constant 0 : index
    %5 = vector.load %arg2[%c0_2, %c0_3] : memref<1x768xf32, #tpu.memory_space<vmem>>, vector<1x768xf32>
    tpu.vector_store %arg2[%c0_2, %c0_3], %4 {strides = array<i32>} : memref<1x768xf32, #tpu.memory_space<vmem>>, vector<1x768xf32>,
    return
  }
  func.func @transform_0(%arg0: i32) -> (i32, i32) {
    %c0_i32 = arith.constant 0 : i32
    %c0_i32_0 = arith.constant 0 : i32
    return %arg0, %c0_i32 : i32, i32
  }
  func.func @transform_1(%arg0: i32) -> (i32, i32) {
    %c0_i32 = arith.constant 0 : i32
    %c0_i32_0 = arith.constant 0 : i32
    return %arg0, %c0_i32 : i32, i32
  }
}

</mosaic_0001>

<llo_original>
// kernel: tpu_custom_call.1
$region0: #{tpu_custom_call.1}
  #allocation0 [shape = 'u32[]', space=smem, size = 0x4, offset = 0x4, fixed_abs, tag = 'smem constant byte address 0x4 - core index']
  #allocation1 [shape = 'u32[144,128]{1,0:T(1,128)}', space=vmem, size = 0x12000, scoped, tag = 'internal scratch']
  %s0 = inlined_call_operand.hbm [shape: f32[1,768], index: 0, kind: input, shape index: {}]
  %s1 = inlined_call_operand.hbm [shape: f32[1,768], index: 1, kind: output, shape index: {}]
  %s2 = sld [smem:[#allocation0]]
  $region18: #{tpu_custom_call.1} parent=0
    _
  %s4 = ssub.s32 1, %s2
  %s5 = scalar_select 0, %s4, %s2
  $region1: #{tpu_custom_call.1} parent=0
    #allocation2 [shape = 'u8[3072]{0}', space=vmem, size = 0xc00, scoped, tag = 'input window, operand 0, single buffered']
    #allocation3 [shape = 's32[1]{0}', space=sflag, size = 0x4, scoped, tag = 'scoped memory for tpu_custom_call.1']
    #allocation4 [shape = 's32[1]{0}', space=sflag, size = 0x4, scoped, tag = 'scoped memory for tpu_custom_call.1']
    #allocation5 [shape = 'u8[3072]{0}', space=vmem, size = 0xc00, scoped, tag = 'output window, operand 0, single buffered']
    %6 = vsyncpa [#allocation3], 0
    %7 = vsyncpa [#allocation4], 0
    // Predicated region
    $region2: #{tpu_custom_call.1} parent=1 // pred_check
      _
    $region3: #{tpu_custom_call.1} parent=1 // pred_check_branch
      %9 = sbr.rel (0) target = $region5
    $region4: #{tpu_custom_call.1} parent=1 // pred_region
      %s11 = ssub.s32 96, 96
      %12 = vsyncadd [#allocation3], %s11
      %s14 = sshll.u32 [#allocation2], 4
      %s15 = int_to_ptr.vmem [resolvable:$true] %s14
      %17 = dma.hbm_to_vmem [thread:$0]  %s0, 96, %s15, [#allocation3]
    $region5: #{tpu_custom_call.1} parent=1 // pred_fallthru
      _
    // Predicated region
    $region6: #{tpu_custom_call.1} parent=1 // pred_check
      _
    $region7: #{tpu_custom_call.1} parent=1 // pred_check_branch
      %19 = sbr.rel (0) target = $region9
    $region8: #{tpu_custom_call.1} parent=1 // pred_region
      %20 = dma.done [#allocation3], 96
    $region9: #{tpu_custom_call.1} parent=1 // pred_fallthru
      _
    %v21 = vld [vmem:[#allocation2] sm:$0x3f]
    %v22 = vmul.f32 %v21, 0.017124753
    %v23 = vadd.f32 %v22, -2.183406
    %v24 = vlaneseq
    %vm25 = vcmp.ge.s32.totalorder %v24, 0
    %vm26 = vcmp.lt.s32.totalorder %v24, 768
    %vm27 = vmand %vm25, %vm26
    %28 = vst.msk [vmem:[#allocation5] sm:$0x3f] %vm27, %v23
    // Predicated region
    $region10: #{tpu_custom_call.1} parent=1 // pred_check
      _
    $region11: #{tpu_custom_call.1} parent=1 // pred_check_branch
      %30 = sbr.rel (0) target = $region13
    $region12: #{tpu_custom_call.1} parent=1 // pred_region
      %s32 = ssub.s32 96, 96
      %33 = vsyncadd [#allocation4], %s32
      %s35 = sshll.u32 [#allocation5], 4
      %s36 = int_to_ptr.vmem [resolvable:$true] %s35
      %38 = dma.vmem_to_hbm [thread:$0]  %s36, 96, %s1, [#allocation4]
    $region13: #{tpu_custom_call.1} parent=1 // pred_fallthru
      _
    // Predicated region
    $region14: #{tpu_custom_call.1} parent=1 // pred_check
      _
    $region15: #{tpu_custom_call.1} parent=1 // pred_check_branch
      %40 = sbr.rel (0) target = $region17
    $region16: #{tpu_custom_call.1} parent=1 // pred_region
      %41 = dma.done [#allocation4], 96
    $region17: #{tpu_custom_call.1} parent=1 // pred_fallthru
      _
    %42 = vsyncpa [#allocation3], 1
    %43 = vsyncpa [#allocation4], 1

</llo_original>
